<compile_context>
chip_gen: v7x
topology: tpu7x:2x2x1
jax: 0.10.0
libtpu: 0.0.40
codegen_flags: <defaults>
</compile_context>

<pallas_src>
import functools

import jax
import jax.numpy as jnp
from jax.experimental import pallas as pl
from jax.experimental.pallas import tpu as pltpu

LN_EPS = 1e-5  # nn.LayerNorm default


def _lin_resblock_kernel(x_ref, wt_ref, b_ref, g_ref, beta_ref, o_ref, *,
                         residual_f32):
    """One row-tile: Linear -> LayerNorm -> ReLU -> residual add."""
    x_in = x_ref[...]                                  # (TM, F), stored dtype
    wt = wt_ref[...]                                   # (F, F) = W.T, MXU dtype

    lhs = x_in if x_in.dtype == wt.dtype else x_in.astype(wt.dtype)
    # Linear on the MXU, f32 accumulation.
    y = jnp.dot(lhs, wt, preferred_element_type=jnp.float32)
    y = y + b_ref[...].astype(jnp.float32)             # (1, F) broadcast

    # One-pass LayerNorm statistics (single cross-lane reduction pair).
    inv_f = 1.0 / y.shape[-1]
    s1 = jnp.sum(y, axis=-1, keepdims=True)
    s2 = jnp.sum(y * y, axis=-1, keepdims=True)
    mean = s1 * inv_f
    var = jnp.maximum(s2 * inv_f - mean * mean, 0.0)   # clamp: E[y^2]-m^2 can go <0
    y_n = (y - mean) * jax.lax.rsqrt(var + LN_EPS)
    y_n = y_n * g_ref[...].astype(jnp.float32) + beta_ref[...].astype(jnp.float32)

    res = jnp.maximum(y_n, 0.0)                        # ReLU
    if residual_f32:
        o_ref[...] = (x_in.astype(jnp.float32) + res).astype(o_ref.dtype)
    else:
        # Small-F / bf16 epilogue trim: add in the stored dtype (VPU-bound regime).
        o_ref[...] = x_in + res.astype(x_in.dtype)


def _vmem_capacity_bytes():
    """Physical per-TensorCore VMEM; conservative fallback = v7x (64 MiB)."""
    try:
        info = pltpu.get_tpu_info()
        cap = getattr(info, "vmem_capacity_bytes", None)
        if cap:
            return int(cap)
    except Exception:
        pass
    return 64 * 1024 * 1024


def prepare_weight_t(weight, mxu_dtype=None):
    """One-time prep (do at model load): transpose W (out,in)->(in,out), optional bf16."""
    wt = weight.T
    if mxu_dtype is not None:
        wt = wt.astype(mxu_dtype)
    return wt


def linear_resblock_prepared(x, wt, bias, gamma, beta, *, tile_m=None):
    """x: (..., F). wt: (F, F) = weight.T (already prepared). Returns x-shaped out."""
    orig_shape = x.shape
    f = orig_shape[-1]
    x2 = x.reshape(-1, f)
    n = x2.shape[0]

    b2 = bias.reshape(1, f)
    g2 = gamma.reshape(1, f)
    beta2 = beta.reshape(1, f)

    x_item = jnp.dtype(x.dtype).itemsize
    w_item = jnp.dtype(wt.dtype).itemsize
    p_item = jnp.dtype(bias.dtype).itemsize

    vmem_cap = _vmem_capacity_bytes()
    budget = int(0.80 * vmem_cap)                       # headroom for Mosaic scratch

    if tile_m is None:
        # Memory-bound op: big row tiles; bigger still on 128-MiB (v5e/v6e) chips.
        tile_m = 1024 if vmem_cap >= (96 << 20) else 512

    pack = 8 * max(1, 4 // x_item)                      # 8 rows (f32) / 16 (bf16)
    rup = lambda v, m: ((v + m - 1) // m) * m

    tm = max(pack, min(rup(tile_m, pack), rup(n, pack)))
    if n >= 2 * pack:
        # Guarantee >= 2 grid steps so the "parallel" axis feeds both v7x cores.
        tm = min(tm, max(pack, (n // 2) // pack * pack))

    def footprint(t):
        return (f * f * w_item                          # W.T, Buffered(1) -> 1 copy
                + 4 * t * f * x_item                    # x + out tiles, double-buffered
                + 3 * f * p_item                        # bias/gamma/beta, Buffered(1)
                + 3 * t * f * 4)                        # f32 intermediates (y, stats, y_n)

    while tm > pack and footprint(tm) > budget:
        tm = max(pack, rup(tm // 2, pack))
    # TODO(synk): if f*f*w_item alone approaches `budget` (very large in_ch on v7x),
    # add a trailing 'arbitrary' K-grid axis + f32 VMEM accumulator instead of a
    # single resident weight.

    vmem_limit = int(min(budget, max(32 << 20, footprint(tm) + (8 << 20))))
    grid = (pl.cdiv(n, tm),)

    residual_f32 = (jnp.dtype(x.dtype) == jnp.dtype(jnp.float32)) or (f > 256)
    kernel = functools.partial(_lin_resblock_kernel, residual_f32=residual_f32)

    def _run(single_buffer_params):
        pm = {"pipeline_mode": pl.Buffered(1)} if single_buffer_params else {}
        in_specs = [
            pl.BlockSpec((tm, f), lambda i: (i, 0)),            # x row tile
            pl.BlockSpec((f, f), lambda i: (0, 0), **pm),       # W.T (resident)
            pl.BlockSpec((1, f), lambda i: (0, 0), **pm),       # bias
            pl.BlockSpec((1, f), lambda i: (0, 0), **pm),       # LN gamma
            pl.BlockSpec((1, f), lambda i: (0, 0), **pm),       # LN beta
        ]
        return pl.pallas_call(
            kernel,
            out_shape=jax.ShapeDtypeStruct((n, f), x.dtype),
            grid_spec=pltpu.PrefetchScalarGridSpec(
                num_scalar_prefetch=0,
                grid=grid,
                in_specs=in_specs,
                out_specs=pl.BlockSpec((tm, f), lambda i: (i, 0)),
            ),
            compiler_params=pltpu.CompilerParams(
                dimension_semantics=("parallel",),
                vmem_limit_bytes=vmem_limit,
            ),
        )(x2, wt, b2, g2, beta2)

    try:
        out = _run(True)                # single-buffer the constant operands
    except Exception:
        out = _run(False)               # fallback if Buffered(1) unsupported

    return out.reshape(orig_shape)


def linear_resblock(x, weight, bias, gamma, beta, *, tile_m=None, mxu_dtype=None):
    """Convenience wrapper: weight in PyTorch (out, in) layout."""
    wt = prepare_weight_t(weight, mxu_dtype=mxu_dtype)
    return linear_resblock_prepared(x, wt, bias, gamma, beta, tile_m=tile_m)


def init_params(key, in_ch, dtype=jnp.float32):
    """Deterministic synthetic params matching the module's __init__ shapes."""
    k_w, k_b = jax.random.split(key)
    bound = 1.0 / (in_ch ** 0.5)  # mimic nn.Linear default init range
    weight = jax.random.uniform(k_w, (in_ch, in_ch), dtype, -bound, bound)
    bias = jax.random.uniform(k_b, (in_ch,), dtype, -bound, bound)
    gamma = jnp.ones((in_ch,), dtype)   # nn.LayerNorm weight
    beta = jnp.zeros((in_ch,), dtype)   # nn.LayerNorm bias
    return weight, bias, gamma, beta


def _reference(x, weight, bias, gamma, beta):
    y = jnp.einsum("...i,oi->...o", x, weight) + bias
    mean = jnp.mean(y, axis=-1, keepdims=True)
    var = jnp.mean((y - mean) ** 2, axis=-1, keepdims=True)
    y = (y - mean) * jax.lax.rsqrt(var + LN_EPS) * gamma + beta
    return x + jnp.maximum(y, 0.0)


if __name__ == "__main__":
    in_ch = 32
    batch, seq = 2, 8

    key = jax.random.PRNGKey(0)
    k_x, k_p = jax.random.split(key)
    x = jax.random.normal(k_x, (batch, seq, in_ch), jnp.float32)
    weight, bias, gamma, beta = init_params(k_p, in_ch)

    # Hoisted (one-time) weight prep, then the fast-path call.
    wt = prepare_weight_t(weight)
    out = linear_resblock_prepared(x, wt, bias, gamma, beta)
    jax.block_until_ready(out)

    ref = _reference(x, weight, bias, gamma, beta)
    assert out.shape == x.shape
    assert jnp.allclose(out, ref, atol=1e-5, rtol=1e-5), "mismatch vs reference"

    # Row count not a multiple of the tile: exercises the masked partial edge block
    # (no wrapper-side row padding / slicing anymore).
    x2 = jax.random.normal(k_x, (3, 7, in_ch), jnp.float32)
    out2 = linear_resblock(x2, weight, bias, gamma, beta)
    jax.block_until_ready(out2)
    ref2 = _reference(x2, weight, bias, gamma, beta)
    assert jnp.allclose(out2, ref2, atol=1e-5, rtol=1e-5), "edge-block mismatch"

    # Optional bf16 MXU feed (perf path); LayerNorm renormalizes, loose tolerance.
    out3 = linear_resblock(x, weight, bias, gamma, beta, mxu_dtype=jnp.bfloat16)
    jax.block_until_ready(out3)
    assert jnp.allclose(out3, ref, atol=1e-1, rtol=1e-1), "bf16 path mismatch"

    print("KERNEL_OK")
</pallas_src>

<mosaic_0001>
module attributes {stable_mosaic.version = 11 : i64} {
  func.func @_lin_resblock_kernel(%arg0: i32, %arg1: memref<8x32xf32, #tpu.memory_space<vmem>>, %arg2: memref<32x32xf32, #tpu.memory_space<vmem>>, %arg3: memref<1x32xf32, #tpu.memory_space<vmem>>, %arg4: memref<1x32xf32, #tpu.memory_space<vmem>>, %arg5: memref<1x32xf32, #tpu.memory_space<vmem>>, %arg6: memref<8x32xf32, #tpu.memory_space<vmem>>) attributes {dimension_semantics = [#tpu.dimension_semantics<parallel>], iteration_bounds = array<i64: 2>, scalar_prefetch = 0 : i64, scratch_operands = 0 : i64, tpu.core_type = #tpu.core_type<tc>, window_params = [{transform_indices = @transform_0, window_bounds = array<i64: 8, 32>}, {pipeline_mode = #tpu.pipeline_mode<synchronous>, transform_indices = @transform_1, window_bounds = array<i64: 32, 32>}, {pipeline_mode = #tpu.pipeline_mode<synchronous>, transform_indices = @transform_2, window_bounds = array<i64: 1, 32>}, {pipeline_mode = #tpu.pipeline_mode<synchronous>, transform_indices = @transform_3, window_bounds = array<i64: 1, 32>}, {pipeline_mode = #tpu.pipeline_mode<synchronous>, transform_indices = @transform_4, window_bounds = array<i64: 1, 32>}, {transform_indices = @transform_5, window_bounds = array<i64: 8, 32>}]} {
    %c0 = arith.constant 0 : index
    %c0_0 = arith.constant 0 : index
    %0 = vector.load %arg1[%c0, %c0_0] : memref<8x32xf32, #tpu.memory_space<vmem>>, vector<8x32xf32>
    %c0_1 = arith.constant 0 : index
    %c0_2 = arith.constant 0 : index
    %1 = vector.load %arg2[%c0_1, %c0_2] : memref<32x32xf32, #tpu.memory_space<vmem>>, vector<32x32xf32>
    %cst = arith.constant dense<0.000000e+00> : vector<8x32xf32>
    %2 = tpu.matmul %0, %1, %cst {dimension_numbers = #tpu.dot_dimension_numbers<[1], [0], [0], [1], [0, 0, 1, 1], [], []>} : vector<8x32xf32>, vector<32x32xf32>, vector<8x32xf32> -> vector<8x32xf32>
    %c0_3 = arith.constant 0 : index
    %c0_4 = arith.constant 0 : index
    %3 = vector.load %arg3[%c0_3, %c0_4] : memref<1x32xf32, #tpu.memory_space<vmem>>, vector<1x32xf32>
    %4 = vector.broadcast %3 : vector<1x32xf32> to vector<8x32xf32>
    %5 = arith.addf %2, %4 : vector<8x32xf32>
    %cst_5 = arith.constant dense<0.000000e+00> : vector<8xf32>
    %6 = vector.multi_reduction <add>, %5, %cst_5 [1] : vector<8x32xf32> to vector<8xf32>
    %7 = vector.shape_cast %6 : vector<8xf32> to vector<8x1xf32>
    %8 = arith.mulf %5, %5 : vector<8x32xf32>
    %cst_6 = arith.constant dense<0.000000e+00> : vector<8xf32>
    %9 = vector.multi_reduction <add>, %8, %cst_6 [1] : vector<8x32xf32> to vector<8xf32>
    %10 = vector.shape_cast %9 : vector<8xf32> to vector<8x1xf32>
    %cst_7 = arith.constant 3.125000e-02 : f32
    %11 = vector.broadcast %cst_7 : f32 to vector<8x1xf32>
    %12 = arith.mulf %7, %11 : vector<8x1xf32>
    %cst_8 = arith.constant 3.125000e-02 : f32
    %13 = vector.broadcast %cst_8 : f32 to vector<8x1xf32>
    %14 = arith.mulf %10, %13 : vector<8x1xf32>
    %15 = arith.mulf %12, %12 : vector<8x1xf32>
    %16 = arith.subf %14, %15 : vector<8x1xf32>
    %cst_9 = arith.constant 0.000000e+00 : f32
    %17 = vector.broadcast %cst_9 : f32 to vector<8x1xf32>
    %18 = arith.maximumf %16, %17 : vector<8x1xf32>
    %19 = vector.broadcast %12 : vector<8x1xf32> to vector<8x32xf32>
    %20 = arith.subf %5, %19 : vector<8x32xf32>
    %cst_10 = arith.constant 9.99999974E-6 : f32
    %21 = vector.broadcast %cst_10 : f32 to vector<8x1xf32>
    %22 = arith.addf %18, %21 : vector<8x1xf32>
    %23 = math.rsqrt %22 : vector<8x1xf32>
    %24 = vector.broadcast %23 : vector<8x1xf32> to vector<8x32xf32>
    %25 = arith.mulf %20, %24 : vector<8x32xf32>
    %c0_11 = arith.constant 0 : index
    %c0_12 = arith.constant 0 : index
    %26 = vector.load %arg4[%c0_11, %c0_12] : memref<1x32xf32, #tpu.memory_space<vmem>>, vector<1x32xf32>
    %27 = vector.broadcast %26 : vector<1x32xf32> to vector<8x32xf32>
    %28 = arith.mulf %25, %27 : vector<8x32xf32>
    %c0_13 = arith.constant 0 : index
    %c0_14 = arith.constant 0 : index
    %29 = vector.load %arg5[%c0_13, %c0_14] : memref<1x32xf32, #tpu.memory_space<vmem>>, vector<1x32xf32>
    %30 = vector.broadcast %29 : vector<1x32xf32> to vector<8x32xf32>
    %31 = arith.addf %28, %30 : vector<8x32xf32>
    %cst_15 = arith.constant 0.000000e+00 : f32
    %32 = vector.broadcast %cst_15 : f32 to vector<8x32xf32>
    %33 = arith.maximumf %31, %32 : vector<8x32xf32>
    %34 = arith.addf %0, %33 : vector<8x32xf32>
    %c0_16 = arith.constant 0 : index
    %c0_17 = arith.constant 0 : index
    %35 = vector.load %arg6[%c0_16, %c0_17] : memref<8x32xf32, #tpu.memory_space<vmem>>, vector<8x32xf32>
    tpu.vector_store %arg6[%c0_16, %c0_17], %34 {strides = array<i32>} : memref<8x32xf32, #tpu.memory_space<vmem>>, vector<8x32xf32>,
    return
  }
  func.func @transform_0(%arg0: i32) -> (i32, i32) {
    %c0_i32 = arith.constant 0 : i32
    %c0_i32_0 = arith.constant 0 : i32
    return %arg0, %c0_i32 : i32, i32
  }
  func.func @transform_1(%arg0: i32) -> (i32, i32) {
    %c0_i32 = arith.constant 0 : i32
    %c0_i32_0 = arith.constant 0 : i32
    %c0_i32_1 = arith.constant 0 : i32
    return %c0_i32, %c0_i32_0 : i32, i32
  }
  func.func @transform_2(%arg0: i32) -> (i32, i32) {
    %c0_i32 = arith.constant 0 : i32
    %c0_i32_0 = arith.constant 0 : i32
    %c0_i32_1 = arith.constant 0 : i32
    return %c0_i32, %c0_i32_0 : i32, i32
  }
  func.func @transform_3(%arg0: i32) -> (i32, i32) {
    %c0_i32 = arith.constant 0 : i32
    %c0_i32_0 = arith.constant 0 : i32
    %c0_i32_1 = arith.constant 0 : i32
    return %c0_i32, %c0_i32_0 : i32, i32
  }
  func.func @transform_4(%arg0: i32) -> (i32, i32) {
    %c0_i32 = arith.constant 0 : i32
    %c0_i32_0 = arith.constant 0 : i32
    %c0_i32_1 = arith.constant 0 : i32
    return %c0_i32, %c0_i32_0 : i32, i32
  }
  func.func @transform_5(%arg0: i32) -> (i32, i32) {
    %c0_i32 = arith.constant 0 : i32
    %c0_i32_0 = arith.constant 0 : i32
    return %arg0, %c0_i32 : i32, i32
  }
}

module attributes {stable_mosaic.version = 11 : i64} {
  func.func @_lin_resblock_kernel(%arg0: i32, %arg1: memref<8x32xf32, #tpu.memory_space<vmem>>, %arg2: memref<32x32xf32, #tpu.memory_space<vmem>>, %arg3: memref<1x32xf32, #tpu.memory_space<vmem>>, %arg4: memref<1x32xf32, #tpu.memory_space<vmem>>, %arg5: memref<1x32xf32, #tpu.memory_space<vmem>>, %arg6: memref<8x32xf32, #tpu.memory_space<vmem>>) attributes {dimension_semantics = [#tpu.dimension_semantics<parallel>], iteration_bounds = array<i64: 2>, scalar_prefetch = 0 : i64, scratch_operands = 0 : i64, tpu.core_type = #tpu.core_type<tc>, window_params = [{transform_indices = @transform_0, window_bounds = array<i64: 8, 32>}, {pipeline_mode = #tpu.pipeline_mode<synchronous>, transform_indices = @transform_1, window_bounds = array<i64: 32, 32>}, {pipeline_mode = #tpu.pipeline_mode<synchronous>, transform_indices = @transform_2, window_bounds = array<i64: 1, 32>}, {pipeline_mode = #tpu.pipeline_mode<synchronous>, transform_indices = @transform_3, window_bounds = array<i64: 1, 32>}, {pipeline_mode = #tpu.pipeline_mode<synchronous>, transform_indices = @transform_4, window_bounds = array<i64: 1, 32>}, {transform_indices = @transform_5, window_bounds = array<i64: 8, 32>}]} {
    %c0 = arith.constant 0 : index
    %c0_0 = arith.constant 0 : index
    %0 = vector.load %arg1[%c0, %c0_0] : memref<8x32xf32, #tpu.memory_space<vmem>>, vector<8x32xf32>
    %c0_1 = arith.constant 0 : index
    %c0_2 = arith.constant 0 : index
    %1 = vector.load %arg2[%c0_1, %c0_2] : memref<32x32xf32, #tpu.memory_space<vmem>>, vector<32x32xf32>
    %cst = arith.constant dense<0.000000e+00> : vector<8x32xf32>
    %2 = tpu.matmul %0, %1, %cst {dimension_numbers = #tpu.dot_dimension_numbers<[1], [0], [0], [1], [0, 0, 1, 1], [], []>} : vector<8x32xf32>, vector<32x32xf32>, vector<8x32xf32> -> vector<8x32xf32>
    %c0_3 = arith.constant 0 : index
    %c0_4 = arith.constant 0 : index
    %3 = vector.load %arg3[%c0_3, %c0_4] : memref<1x32xf32, #tpu.memory_space<vmem>>, vector<1x32xf32>
    %4 = vector.broadcast %3 : vector<1x32xf32> to vector<8x32xf32>
    %5 = arith.addf %2, %4 : vector<8x32xf32>
    %cst_5 = arith.constant dense<0.000000e+00> : vector<8xf32>
    %6 = vector.multi_reduction <add>, %5, %cst_5 [1] : vector<8x32xf32> to vector<8xf32>
    %7 = vector.shape_cast %6 : vector<8xf32> to vector<8x1xf32>
    %8 = arith.mulf %5, %5 : vector<8x32xf32>
    %cst_6 = arith.constant dense<0.000000e+00> : vector<8xf32>
    %9 = vector.multi_reduction <add>, %8, %cst_6 [1] : vector<8x32xf32> to vector<8xf32>
    %10 = vector.shape_cast %9 : vector<8xf32> to vector<8x1xf32>
    %cst_7 = arith.constant 3.125000e-02 : f32
    %11 = vector.broadcast %cst_7 : f32 to vector<8x1xf32>
    %12 = arith.mulf %7, %11 : vector<8x1xf32>
    %cst_8 = arith.constant 3.125000e-02 : f32
    %13 = vector.broadcast %cst_8 : f32 to vector<8x1xf32>
    %14 = arith.mulf %10, %13 : vector<8x1xf32>
    %15 = arith.mulf %12, %12 : vector<8x1xf32>
    %16 = arith.subf %14, %15 : vector<8x1xf32>
    %cst_9 = arith.constant 0.000000e+00 : f32
    %17 = vector.broadcast %cst_9 : f32 to vector<8x1xf32>
    %18 = arith.maximumf %16, %17 : vector<8x1xf32>
    %19 = vector.broadcast %12 : vector<8x1xf32> to vector<8x32xf32>
    %20 = arith.subf %5, %19 : vector<8x32xf32>
    %cst_10 = arith.constant 9.99999974E-6 : f32
    %21 = vector.broadcast %cst_10 : f32 to vector<8x1xf32>
    %22 = arith.addf %18, %21 : vector<8x1xf32>
    %23 = math.rsqrt %22 : vector<8x1xf32>
    %24 = vector.broadcast %23 : vector<8x1xf32> to vector<8x32xf32>
    %25 = arith.mulf %20, %24 : vector<8x32xf32>
    %c0_11 = arith.constant 0 : index
    %c0_12 = arith.constant 0 : index
    %26 = vector.load %arg4[%c0_11, %c0_12] : memref<1x32xf32, #tpu.memory_space<vmem>>, vector<1x32xf32>
    %27 = vector.broadcast %26 : vector<1x32xf32> to vector<8x32xf32>
    %28 = arith.mulf %25, %27 : vector<8x32xf32>
    %c0_13 = arith.constant 0 : index
    %c0_14 = arith.constant 0 : index
    %29 = vector.load %arg5[%c0_13, %c0_14] : memref<1x32xf32, #tpu.memory_space<vmem>>, vector<1x32xf32>
    %30 = vector.broadcast %29 : vector<1x32xf32> to vector<8x32xf32>
    %31 = arith.addf %28, %30 : vector<8x32xf32>
    %cst_15 = arith.constant 0.000000e+00 : f32
    %32 = vector.broadcast %cst_15 : f32 to vector<8x32xf32>
    %33 = arith.maximumf %31, %32 : vector<8x32xf32>
    %34 = arith.addf %0, %33 : vector<8x32xf32>
    %c0_16 = arith.constant 0 : index
    %c0_17 = arith.constant 0 : index
    %35 = vector.load %arg6[%c0_16, %c0_17] : memref<8x32xf32, #tpu.memory_space<vmem>>, vector<8x32xf32>
    tpu.vector_store %arg6[%c0_16, %c0_17], %34 {strides = array<i32>} : memref<8x32xf32, #tpu.memory_space<vmem>>, vector<8x32xf32>,
    return
  }
  func.func @transform_0(%arg0: i32) -> (i32, i32) {
    %c0_i32 = arith.constant 0 : i32
    %c0_i32_0 = arith.constant 0 : i32
    return %arg0, %c0_i32 : i32, i32
  }
  func.func @transform_1(%arg0: i32) -> (i32, i32) {
    %c0_i32 = arith.constant 0 : i32
    %c0_i32_0 = arith.constant 0 : i32
    %c0_i32_1 = arith.constant 0 : i32
    return %c0_i32, %c0_i32_0 : i32, i32
  }
  func.func @transform_2(%arg0: i32) -> (i32, i32) {
    %c0_i32 = arith.constant 0 : i32
    %c0_i32_0 = arith.constant 0 : i32
    %c0_i32_1 = arith.constant 0 : i32
    return %c0_i32, %c0_i32_0 : i32, i32
  }
  func.func @transform_3(%arg0: i32) -> (i32, i32) {
    %c0_i32 = arith.constant 0 : i32
    %c0_i32_0 = arith.constant 0 : i32
    %c0_i32_1 = arith.constant 0 : i32
    return %c0_i32, %c0_i32_0 : i32, i32
  }
  func.func @transform_4(%arg0: i32) -> (i32, i32) {
    %c0_i32 = arith.constant 0 : i32
    %c0_i32_0 = arith.constant 0 : i32
    %c0_i32_1 = arith.constant 0 : i32
    return %c0_i32, %c0_i32_0 : i32, i32
  }
  func.func @transform_5(%arg0: i32) -> (i32, i32) {
    %c0_i32 = arith.constant 0 : i32
    %c0_i32_0 = arith.constant 0 : i32
    return %arg0, %c0_i32 : i32, i32
  }
}

</mosaic_0001>

<llo_original>
// kernel: tpu_custom_call.1
$region0: #{tpu_custom_call.1}
  #allocation0 [shape = 'u32[]', space=smem, size = 0x4, offset = 0x4, fixed_abs, tag = 'smem constant byte address 0x4 - core index']
  #allocation1 [shape = 'u32[144,128]{1,0:T(1,128)}', space=vmem, size = 0x12000, scoped, tag = 'internal scratch']
  %s0 = inlined_call_operand.hbm [shape: f32[16,32], index: 0, kind: input, shape index: {}]
  %s1 = inlined_call_operand.hbm [shape: f32[32,32], index: 1, kind: input, shape index: {}]
  %s2 = inlined_call_operand.vmem [shape: f32[1,32], index: 2, kind: input, shape index: {}]
  %s3 = inlined_call_operand.vmem [shape: f32[1,32], index: 3, kind: input, shape index: {}]
  %s4 = inlined_call_operand.vmem [shape: f32[1,32], index: 4, kind: input, shape index: {}]
  %s5 = inlined_call_operand.hbm [shape: f32[16,32], index: 5, kind: output, shape index: {}]
  %s6 = sld [smem:[#allocation0]]
  $region61: #{tpu_custom_call.1} parent=0
    _
  %s8 = ssub.s32 1, %s6
  %s9 = scalar_select 0, %s8, %s6
  $region1: #{tpu_custom_call.1} parent=0
    #allocation2 [shape = 'u8[8192]{0}', space=vmem, size = 0x2000, scoped, tag = 'input window, operand 0']
    #allocation3 [shape = 's32[2]{0}', space=sflag, size = 0x8, scoped, tag = 'scoped memory for tpu_custom_call.1']
    #allocation4 [shape = 's32[2]{0}', space=sflag, size = 0x8, scoped, tag = 'scoped memory for tpu_custom_call.1']
    #allocation5 [shape = 'u8[16384]{0}', space=vmem, size = 0x4000, scoped, tag = 'input window, operand 1, single buffered']
    #allocation6 [shape = 's32[1]{0}', space=sflag, size = 0x4, scoped, tag = 'scoped memory for tpu_custom_call.1']
    #allocation7 [shape = 'u8[8192]{0}', space=vmem, size = 0x2000, scoped, tag = 'output window, operand 0']
    %10 = vsyncpa [#allocation3], 0
    %s11 = scalar_lea.sflag [#allocation3], 1
    %12 = vsyncpa %s11, 0
    %13 = vsyncpa [#allocation6], 0
    %14 = vsyncpa [#allocation4], 0
    %s15 = scalar_lea.sflag [#allocation4], 1
    %16 = vsyncpa %s15, 0
    loop: start=0, step=1, limit=4
    $region2: #{tpu_custom_call.1} parent=1 // loop_pre_header
      _
    $region3: #{tpu_custom_call.1} parent=1 // loop_header
      %s18 = sphi 0, %s22
      %p19 = scmp.ge.s32.totalorder %s18, 4
      %s28 = sphi 0, %s30
      %s31 = sphi 0, %s28
      %s32 = sphi 0, %s31
      %s48 = sphi 0, %s32
      %s52 = sphi 0, %s52
      %s54 = sphi 0, %s52
      %s55 = sphi 0, %s54
      %s69 = sphi 0, %s55
      %s73 = sphi 0, %s73
      %s75 = sphi 0, %s73
      %s76 = sphi 0, %s75
      %s90 = sphi 0, %s76
      %s94 = sphi 0, %s94
      %s96 = sphi 0, %s94
      %s97 = sphi 0, %s96
      %s111 = sphi 0, %s97
      %s115 = sphi 0, %s115
      %s117 = sphi 0, %s115
      %s118 = sphi 0, %s117
      %s132 = sphi 0, %s118
      %s138 = sphi 0, %s140
      %s141 = sphi 0, %s138
      %s142 = sphi 0, %s141
      %s158 = sphi 0, %s142
    $region4: #{tpu_custom_call.1} parent=1 // loop_header_branch
      %21 = sbr.rel (%p19) target = $region8
    $region5: #{tpu_custom_call.1} parent=1 // loop_body
      %s23 = ssub.s32 %s18, 1
      %s24 = ssub.s32 %s18, 2
      %s25 = sadd.s32 %s18, 1
      %s26 = ssub.s32 %s18, %s25
      %p27 = scmp.eq.s32.totalorder %s26, 0
      %s29 = sadd.s32 %s28, 1
      %s30 = scalar_select %p27, %s28, %s29
      %p33 = pneg %p27
      %p34 = scmp.eq.s32.totalorder %s18, 1
      %p35 = por %p33, %p34
      %p36 = scmp.ne.s32.totalorder %s28, %s31
      %p37 = scmp.eq.s32.totalorder %s18, 0
      %p38 = por %p36, %p37
      %p39 = scmp.ne.s32.totalorder %s28, %s31
      %p40 = scmp.eq.s32.totalorder %s23, 1
      %p41 = por %p39, %p40
      %p42 = scmp.ne.s32.totalorder %s31, %s32
      %p43 = scmp.eq.s32.totalorder %s23, 0
      %p44 = por %p42, %p43
      %p45 = scmp.ne.s32.totalorder %s31, %s32
      %p46 = scmp.eq.s32.totalorder %s24, 1
      %p47 = por %p45, %p46
      %p49 = scmp.ne.s32.totalorder %s32, %s48
      %p50 = scmp.eq.s32.totalorder %s24, 0
      %p51 = por %p49, %p50
      %s53 = sadd.s32 %s52, 1
      %p56 = scmp.eq.s32.totalorder %s18, 1
      %p57 = scmp.ne.s32.totalorder %s52, %s54
      %p58 = scmp.eq.s32.totalorder %s18, 0
      %p59 = por %p57, %p58
      %p60 = scmp.ne.s32.totalorder %s52, %s54
      %p61 = scmp.eq.s32.totalorder %s23, 1
      %p62 = por %p60, %p61
      %p63 = scmp.ne.s32.totalorder %s54, %s55
      %p64 = scmp.eq.s32.totalorder %s23, 0
      %p65 = por %p63, %p64
      %p66 = scmp.ne.s32.totalorder %s54, %s55
      %p67 = scmp.eq.s32.totalorder %s24, 1
      %p68 = por %p66, %p67
      %p70 = scmp.ne.s32.totalorder %s55, %s69
      %p71 = scmp.eq.s32.totalorder %s24, 0
      %p72 = por %p70, %p71
      %s74 = sadd.s32 %s73, 1
      %p77 = scmp.eq.s32.totalorder %s18, 1
      %p78 = scmp.ne.s32.totalorder %s73, %s75
      %p79 = scmp.eq.s32.totalorder %s18, 0
      %p80 = por %p78, %p79
      %p81 = scmp.ne.s32.totalorder %s73, %s75
      %p82 = scmp.eq.s32.totalorder %s23, 1
      %p83 = por %p81, %p82
      %p84 = scmp.ne.s32.totalorder %s75, %s76
      %p85 = scmp.eq.s32.totalorder %s23, 0
      %p86 = por %p84, %p85
      %p87 = scmp.ne.s32.totalorder %s75, %s76
      %p88 = scmp.eq.s32.totalorder %s24, 1
      %p89 = por %p87, %p88
      %p91 = scmp.ne.s32.totalorder %s76, %s90
      %p92 = scmp.eq.s32.totalorder %s24, 0
      %p93 = por %p91, %p92
      %s95 = sadd.s32 %s94, 1
      %p98 = scmp.eq.s32.totalorder %s18, 1
      %p99 = scmp.ne.s32.totalorder %s94, %s96
      %p100 = scmp.eq.s32.totalorder %s18, 0
      %p101 = por %p99, %p100
      %p102 = scmp.ne.s32.totalorder %s94, %s96
      %p103 = scmp.eq.s32.totalorder %s23, 1
      %p104 = por %p102, %p103
      %p105 = scmp.ne.s32.totalorder %s96, %s97
      %p106 = scmp.eq.s32.totalorder %s23, 0
      %p107 = por %p105, %p106
      %p108 = scmp.ne.s32.totalorder %s96, %s97
      %p109 = scmp.eq.s32.totalorder %s24, 1
      %p110 = por %p108, %p109
      %p112 = scmp.ne.s32.totalorder %s97, %s111
      %p113 = scmp.eq.s32.totalorder %s24, 0
      %p114 = por %p112, %p113
      %s116 = sadd.s32 %s115, 1
      %p119 = scmp.eq.s32.totalorder %s18, 1
      %p120 = scmp.ne.s32.totalorder %s115, %s117
      %p121 = scmp.eq.s32.totalorder %s18, 0
      %p122 = por %p120, %p121
      %p123 = scmp.ne.s32.totalorder %s115, %s117
      %p124 = scmp.eq.s32.totalorder %s23, 1
      %p125 = por %p123, %p124
      %p126 = scmp.ne.s32.totalorder %s117, %s118
      %p127 = scmp.eq.s32.totalorder %s23, 0
      %p128 = por %p126, %p127
      %p129 = scmp.ne.s32.totalorder %s117, %s118
      %p130 = scmp.eq.s32.totalorder %s24, 1
      %p131 = por %p129, %p130
      %p133 = scmp.ne.s32.totalorder %s118, %s132
      %p134 = scmp.eq.s32.totalorder %s24, 0
      %p135 = por %p133, %p134
      %s136 = ssub.s32 %s18, %s25
      %p137 = scmp.eq.s32.totalorder %s136, 0
      %s139 = sadd.s32 %s138, 1
      %s140 = scalar_select %p137, %s138, %s139
      %p143 = pneg %p137
      %p144 = scmp.eq.s32.totalorder %s18, 1
      %p145 = por %p143, %p144
      %p146 = scmp.ne.s32.totalorder %s138, %s141
      %p147 = scmp.eq.s32.totalorder %s18, 0
      %p148 = por %p146, %p147
      %p149 = scmp.ne.s32.totalorder %s138, %s141
      %p150 = scmp.eq.s32.totalorder %s23, 1
      %p151 = por %p149, %p150
      %p152 = scmp.ne.s32.totalorder %s141, %s142
      %p153 = scmp.eq.s32.totalorder %s23, 0
      %p154 = por %p152, %p153
      %p155 = scmp.ne.s32.totalorder %s141, %s142
      %p156 = scmp.eq.s32.totalorder %s24, 1
      %p157 = por %p155, %p156
      %p159 = scmp.ne.s32.totalorder %s142, %s158
      %p160 = scmp.eq.s32.totalorder %s24, 0
      %p161 = por %p159, %p160
      %p162 = scmp.le.s32.totalorder 1, %s18
      %p163 = scmp.lt.s32.totalorder %s18, 3
      %p164 = pnand %p162, %p163
      %p165 = pneg %p164
      // Predicated region
      $region9: #{tpu_custom_call.1} parent=5 // pred_check
        _
      $region10: #{tpu_custom_call.1} parent=5 // pred_check_branch
        %167 = sbr.rel (%p164) target = $region12
      $region11: #{tpu_custom_call.1} parent=5 // pred_region
        %s168 = ssub.s32 %s18, 1
        // Predicated region
        $region13: #{tpu_custom_call.1} parent=11 // pred_check
          %p169 = pneg %p65
        $region14: #{tpu_custom_call.1} parent=11 // pred_check_branch
          %171 = sbr.rel (%p169) target = $region16
        $region15: #{tpu_custom_call.1} parent=11 // pred_region
          %s173 = ssub.s32 512, 512
          %174 = vsyncadd [#allocation6], %s173
          %s175 = sshll.u32 [#allocation5], 4
          %s176 = int_to_ptr.vmem [resolvable:$true] %s175
          %181 = dma.hbm_to_vmem [thread:$0]  %s1, 512, %s176, [#allocation6], 128, 128, 8
        $region16: #{tpu_custom_call.1} parent=11 // pred_fallthru
          _
        // Predicated region
        $region17: #{tpu_custom_call.1} parent=11 // pred_check
          %p182 = pneg %p86
        $region18: #{tpu_custom_call.1} parent=11 // pred_check_branch
          %184 = sbr.rel (%p182) target = $region20
        $region19: #{tpu_custom_call.1} parent=11 // pred_region
          _
        $region20: #{tpu_custom_call.1} parent=11 // pred_fallthru
          _
        // Predicated region
        $region21: #{tpu_custom_call.1} parent=11 // pred_check
          %p185 = pneg %p107
        $region22: #{tpu_custom_call.1} parent=11 // pred_check_branch
          %187 = sbr.rel (%p185) target = $region24
        $region23: #{tpu_custom_call.1} parent=11 // pred_region
          _
        $region24: #{tpu_custom_call.1} parent=11 // pred_fallthru
          _
        // Predicated region
        $region25: #{tpu_custom_call.1} parent=11 // pred_check
          %p188 = pneg %p128
        $region26: #{tpu_custom_call.1} parent=11 // pred_check_branch
          %190 = sbr.rel (%p188) target = $region28
        $region27: #{tpu_custom_call.1} parent=11 // pred_region
          _
        $region28: #{tpu_custom_call.1} parent=11 // pred_fallthru
          _
      $region12: #{tpu_custom_call.1} parent=5 // pred_fallthru
        _
      %p191 = scmp.lt.s32.totalorder %s18, 2
      // Predicated region
      $region29: #{tpu_custom_call.1} parent=5 // pred_check
        %p192 = pneg %p191
      $region30: #{tpu_custom_call.1} parent=5 // pred_check_branch
        %194 = sbr.rel (%p192) target = $region32
      $region31: #{tpu_custom_call.1} parent=5 // pred_region
        // Predicated region
        $region33: #{tpu_custom_call.1} parent=31 // pred_check
          %p195 = pneg %p38
        $region34: #{tpu_custom_call.1} parent=31 // pred_check_branch
          %197 = sbr.rel (%p195) target = $region36
        $region35: #{tpu_custom_call.1} parent=31 // pred_region
          %s198 = sand.u32 %s28, 1
          %s199 = scalar_lea.sflag [#allocation3], %s198
          %s200 = sand.u32 %s28, 1
          %s201 = smul.addr %s200, 8
          %s202 = scalar_lea.vmem [#allocation2], %s201
          %s204 = ssub.s32 128, 128
          %205 = vsyncadd %s199, %s204
          %s206 = smul.addr %s18, 128
          %s207 = scalar_lea.hbm %s0, %s206
          %s209 = sshll.u32 %s202, 4
          %s210 = int_to_ptr.vmem [resolvable:$true] %s209
          %212 = dma.hbm_to_vmem [thread:$0]  %s207, 128, %s210, %s199
        $region36: #{tpu_custom_call.1} parent=31 // pred_fallthru
          _
      $region32: #{tpu_custom_call.1} parent=5 // pred_fallthru
        _
      %p213 = scmp.le.s32.totalorder 1, %s18
      %p214 = scmp.lt.s32.totalorder %s18, 3
      %p215 = pnand %p213, %p214
      %p216 = pneg %p215
      // Predicated region
      $region37: #{tpu_custom_call.1} parent=5 // pred_check
        _
      $region38: #{tpu_custom_call.1} parent=5 // pred_check_branch
        %218 = sbr.rel (%p215) target = $region40
      $region39: #{tpu_custom_call.1} parent=5 // pred_region
        %s219 = ssub.s32 %s18, 1
        %s220 = sand.u32 %s31, 1
        %s221 = scalar_lea.sflag [#allocation3], %s220
        %s222 = sand.u32 %s31, 1
        %s223 = smul.addr %s222, 8
        %s224 = scalar_lea.vmem [#allocation2], %s223
        // Predicated region
        $region41: #{tpu_custom_call.1} parent=39 // pred_check
          %p225 = pneg %p44
        $region42: #{tpu_custom_call.1} parent=39 // pred_check_branch
          %227 = sbr.rel (%p225) target = $region44
        $region43: #{tpu_custom_call.1} parent=39 // pred_region
          %228 = dma.done %s221, 128
        $region44: #{tpu_custom_call.1} parent=39 // pred_fallthru
          _
        // Predicated region
        $region45: #{tpu_custom_call.1} parent=39 // pred_check
          %p229 = pneg %p65
        $region46: #{tpu_custom_call.1} parent=39 // pred_check_branch
          %231 = sbr.rel (%p229) target = $region48
        $region47: #{tpu_custom_call.1} parent=39 // pred_region
          %232 = dma.done [#allocation6], 512
        $region48: #{tpu_custom_call.1} parent=39 // pred_fallthru
          _
        %s233 = sand.u32 %s31, 1
        %s234 = scalar_lea.sflag [#allocation3], %s233
        %s235 = sand.u32 %s31, 1
        %s236 = smul.addr %s235, 8
        %s237 = scalar_lea.vmem [#allocation2], %s236
        %p238 = pneg %p44
        %p239 = pneg %p41
        %p240 = pneg %p65
        %p241 = pneg %p62
        %p242 = pneg %p86
        %p243 = pneg %p83
        %p244 = pneg %p107
        %p245 = pneg %p104
        %p246 = pneg %p128
        %p247 = pneg %p125
        %p248 = pneg %p154
        %p249 = pneg %p151
        %s250 = sand.u32 %s141, 1
        %s251 = scalar_lea.sflag [#allocation4], %s250
        %s252 = sand.u32 %s141, 1
        %s253 = smul.addr %s252, 8
        %s254 = scalar_lea.vmem [#allocation7], %s253
        %v255 = vld [vmem:[%s224] sm:$0xff]
        %v256 = vld [vmem:[#allocation5] sm:$0xff]
        %v257 = vld [vmem:[#allocation5 + $0x8] sm:$0xff]
        %v258 = vld [vmem:[#allocation5 + $0x10] sm:$0xff]
        %v259 = vld [vmem:[#allocation5 + $0x18] sm:$0xff]
        %v260 = vld [vmem:[%s2] sm:$0x1]
        %v262 = vlaneseq
        %v263 = vshrl.u32 %v262, 7
        %v264 = vsub.s32 0, %v263
        %v265 = vrot.slane %v260, %v264
        %vm267 = vcmask 261120
        %v269 = vsel %vm267, %v255, 0
        %271 = vmatprep.subr.mxu0 0.0
        %272 = vmatpush1.msra.mxu0 %v256
        %273 = vmatprep.subr.mxu0 0.0
        %274 = vmatpush1.msra.mxu0 %v257
        %275 = vmatprep.subr.mxu0 0.0
        %276 = vmatpush1.msra.mxu0 %v258
        %277 = vmatprep.subr.mxu0 0.0
        %278 = vmatpush1.msra.mxu0 %v259
        %279 = vmatprep.subr.mxu0 0.0
        %280 = vmatpush1.msra.mxu0 0.0
        %281 = vmatprep.subr.mxu0 0.0
        %282 = vmatpush1.msra.mxu0 0.0
        %283 = vmatprep.subr.mxu0 0.0
        %284 = vmatpush1.msra.mxu0 0.0
        %285 = vmatprep.subr.mxu0 0.0
        %286 = vmatpush1.msra.mxu0 0.0
        %287 = vmatprep.subr.mxu0 0.0
        %288 = vmatpush1.msra.mxu0 0.0
        %289 = vmatprep.subr.mxu0 0.0
        %290 = vmatpush1.msra.mxu0 0.0
        %291 = vmatprep.subr.mxu0 0.0
        %292 = vmatpush1.msra.mxu0 0.0
        %293 = vmatprep.subr.mxu0 0.0
        %294 = vmatpush1.msra.mxu0 0.0
        %295 = vmatprep.subr.mxu0 0.0
        %296 = vmatpush1.msra.mxu0 0.0
        %297 = vmatprep.subr.mxu0 0.0
        %298 = vmatpush1.msra.mxu0 0.0
        %299 = vmatprep.subr.mxu0 0.0
        %300 = vmatpush1.msra.mxu0 0.0
        %301 = vmatprep.subr.mxu0 0.0
        %302 = vmatpush1.msra.mxu0 0.0
        %303 = vmatprep.subr.mxu0 0.0
        %304 = vmatpush1.msra.mxu0 0.0
        %305 = vmatprep.subr.mxu0 0.0
        %306 = vmatpush1.msra.mxu0 0.0
        %307 = vmatprep.subr.mxu0 0.0
        %308 = vmatpush1.msra.mxu0 0.0
        %309 = vmatprep.subr.mxu0 0.0
        %310 = vmatpush1.msra.mxu0 0.0
        %311 = vmatprep.subr.mxu0 0.0
        %312 = vmatpush1.msra.mxu0 0.0
        %313 = vmatprep.subr.mxu0 0.0
        %314 = vmatpush1.msra.mxu0 0.0
        %315 = vmatprep.subr.mxu0 0.0
        %316 = vmatpush1.msra.mxu0 0.0
        %317 = vmatprep.subr.mxu0 0.0
        %318 = vmatpush1.msra.mxu0 0.0
        %319 = vmatprep.subr.mxu0 0.0
        %320 = vmatpush1.msra.mxu0 0.0
        %321 = vmatprep.subr.mxu0 0.0
        %322 = vmatpush1.msra.mxu0 0.0
        %323 = vmatprep.subr.mxu0 0.0
        %324 = vmatpush1.msra.mxu0 0.0
        %325 = vmatprep.subr.mxu0 0.0
        %326 = vmatpush1.msra.mxu0 0.0
        %327 = vmatprep.subr.mxu0 0.0
        %328 = vmatpush1.msra.mxu0 0.0
        %329 = vmatprep.subr.mxu0 0.0
        %330 = vmatpush1.msra.mxu0 0.0
        %331 = vmatprep.subr.mxu0 0.0
        %332 = vmatpush1.msra.mxu0 0.0
        %333 = vmatprep.subr.mxu0 0.0
        %334 = vmatpush1.msra.mxu0 0.0
        %335 = vmatprep.mubr.f32.mxu0 0.0
        %336 = vmatmul.mubr.f32.gmra.mrb[0].mxu0 %v269
        %v337 = vpop.f32.mrb[0].mxu0
        %v338 = vadd.f32 %v265, %v337
        %v339 = vpop.f32.mrb[0].mxu0
        %340 = vdwg.mxu0
        %v341 = vsel %vm267, %v338, 0.0
        %342 = vadd.xlane.f32.xlu0 %v341
        %v343 = vpop.xlane.xlu0 %342
        %v344 = vmul.f32 %v338, %v338
        %v345 = vsel %vm267, %v344, 0.0
        %346 = vadd.xlane.f32.xlu0 %v345
        %v347 = vpop.xlane.xlu0 %346
        %v348 = vmul.f32 %v343, 0.03125
        %v349 = vmul.f32 %v347, 0.03125
        %v350 = vmul.f32 %v348, %v348
        %v351 = vsub.f32 %v349, %v350
        %v352 = vmax.f32 %v351, 0.0
        %v353 = vsub.f32 %v338, %v348
        %v354 = vadd.f32 %v352, 1e-05
        %v355 = vrsqrt.pop %v354
        %v356 = vmul.f32 %v353, %v355
        %v357 = vld [vmem:[%s3] sm:$0x1]
        %v359 = vlaneseq
        %v360 = vshrl.u32 %v359, 7
        %v361 = vsub.s32 0, %v360
        %v362 = vrot.slane %v357, %v361
        %v364 = vmul.f32 %v356, %v362
        %v365 = vld [vmem:[%s4] sm:$0x1]
        %v367 = vlaneseq
        %v368 = vshrl.u32 %v367, 7
        %v369 = vsub.s32 0, %v368
        %v370 = vrot.slane %v365, %v369
        %v372 = vadd.f32 %v364, %v370
        %v373 = vmax.f32 %v372, 0.0
        %v374 = vadd.f32 %v255, %v373
        %375 = vst.msk [vmem:[%s254] sm:$0xff] %vm267, %v374
        %s376 = sand.u32 %s141, 1
        %s377 = scalar_lea.sflag [#allocation4], %s376
        %s378 = sand.u32 %s141, 1
        %s379 = smul.addr %s378, 8
        %s380 = scalar_lea.vmem [#allocation7], %s379
        // Predicated region
        $region49: #{tpu_custom_call.1} parent=39 // pred_check
          %p381 = pneg %p151
        $region50: #{tpu_custom_call.1} parent=39 // pred_check_branch
          %383 = sbr.rel (%p381) target = $region52
        $region51: #{tpu_custom_call.1} parent=39 // pred_region
          %s385 = ssub.s32 128, 128
          %386 = vsyncadd %s377, %s385
          %s387 = smul.addr %s23, 128
          %s388 = scalar_lea.hbm %s5, %s387
          %s390 = sshll.u32 %s380, 4
          %s391 = int_to_ptr.vmem [resolvable:$true] %s390
          %393 = dma.vmem_to_hbm [thread:$0]  %s391, 128, %s388, %s377
        $region52: #{tpu_custom_call.1} parent=39 // pred_fallthru
          _
      $region40: #{tpu_custom_call.1} parent=5 // pred_fallthru
        _
      %p394 = scmp.le.s32.totalorder 2, %s18
      // Predicated region
      $region53: #{tpu_custom_call.1} parent=5 // pred_check
        %p395 = pneg %p394
      $region54: #{tpu_custom_call.1} parent=5 // pred_check_branch
        %397 = sbr.rel (%p395) target = $region56
      $region55: #{tpu_custom_call.1} parent=5 // pred_region
        %s398 = ssub.s32 %s18, 2
        // Predicated region
        $region57: #{tpu_custom_call.1} parent=55 // pred_check
          %p399 = pneg %p157
        $region58: #{tpu_custom_call.1} parent=55 // pred_check_branch
          %401 = sbr.rel (%p399) target = $region60
        $region59: #{tpu_custom_call.1} parent=55 // pred_region
          %s402 = sand.u32 %s142, 1
          %s403 = scalar_lea.sflag [#allocation4], %s402
          %s404 = sand.u32 %s142, 1
          %s405 = smul.addr %s404, 8
          %s406 = scalar_lea.vmem [#allocation7], %s405
          %407 = dma.done %s403, 128
        $region60: #{tpu_custom_call.1} parent=55 // pred_fallthru
          _
      $region56: #{tpu_custom_call.1} parent=5 // pred_fallthru
        _
    $region6: #{tpu_custom_call.1} parent=1 // loop_footer
      %s22 = sadd.s32 1, %s18
    $region7: #{tpu_custom_call.1} parent=1 // loop_footer_branch
      %17 = sbr.rel target = $region3
    $region8: #{tpu_custom_call.1} parent=1 // loop_exit
      _
    %408 = vsyncpa [#allocation3], 1
    %s409 = scalar_lea.sflag [#allocation3], 1
    %410 = vsyncpa %s409, 1
    %411 = vsyncpa [#allocation6], 1
    %412 = vsyncpa [#allocation4], 1
    %s413 = scalar_lea.sflag [#allocation4], 1
    %414 = vsyncpa %s413, 1

// kernel: tpu_custom_call.1
$region0: #{tpu_custom_call.1}
  #allocation0 [shape = 'u32[]', space=smem, size = 0x4, offset = 0x4, fixed_abs, tag = 'smem constant byte address 0x4 - core index']
  #allocation1 [shape = 'u32[144,128]{1,0:T(1,128)}', space=vmem, size = 0x12000, scoped, tag = 'internal scratch']
  %s0 = inlined_call_operand.hbm [shape: f32[16,32], index: 0, kind: input, shape index: {}]
  %s1 = inlined_call_operand.hbm [shape: f32[32,32], index: 1, kind: input, shape index: {}]
  %s2 = inlined_call_operand.vmem [shape: f32[1,32], index: 2, kind: input, shape index: {}]
  %s3 = inlined_call_operand.vmem [shape: f32[1,32], index: 3, kind: input, shape index: {}]
  %s4 = inlined_call_operand.vmem [shape: f32[1,32], index: 4, kind: input, shape index: {}]
  %s5 = inlined_call_operand.hbm [shape: f32[16,32], index: 5, kind: output, shape index: {}]
  %s6 = sld [smem:[#allocation0]]
  $region61: #{tpu_custom_call.1} parent=0
    _
  %s8 = ssub.s32 1, %s6
  %s9 = scalar_select 0, %s8, %s6
  $region1: #{tpu_custom_call.1} parent=0
    #allocation2 [shape = 'u8[8192]{0}', space=vmem, size = 0x2000, scoped, tag = 'input window, operand 0']
    #allocation3 [shape = 's32[2]{0}', space=sflag, size = 0x8, scoped, tag = 'scoped memory for tpu_custom_call.1']
    #allocation4 [shape = 's32[2]{0}', space=sflag, size = 0x8, scoped, tag = 'scoped memory for tpu_custom_call.1']
    #allocation5 [shape = 'u8[16384]{0}', space=vmem, size = 0x4000, scoped, tag = 'input window, operand 1, single buffered']
    #allocation6 [shape = 's32[1]{0}', space=sflag, size = 0x4, scoped, tag = 'scoped memory for tpu_custom_call.1']
    #allocation7 [shape = 'u8[8192]{0}', space=vmem, size = 0x2000, scoped, tag = 'output window, operand 0']
    %10 = vsyncpa [#allocation3], 0
    %s11 = scalar_lea.sflag [#allocation3], 1
    %12 = vsyncpa %s11, 0
    %13 = vsyncpa [#allocation6], 0
    %14 = vsyncpa [#allocation4], 0
    %s15 = scalar_lea.sflag [#allocation4], 1
    %16 = vsyncpa %s15, 0
    loop: start=0, step=1, limit=4
    $region2: #{tpu_custom_call.1} parent=1 // loop_pre_header
      _
    $region3: #{tpu_custom_call.1} parent=1 // loop_header
      %s18 = sphi 0, %s22
      %p19 = scmp.ge.s32.totalorder %s18, 4
      %s28 = sphi 0, %s30
      %s31 = sphi 0, %s28
      %s32 = sphi 0, %s31
      %s48 = sphi 0, %s32
      %s52 = sphi 0, %s52
      %s54 = sphi 0, %s52
      %s55 = sphi 0, %s54
      %s69 = sphi 0, %s55
      %s73 = sphi 0, %s73
      %s75 = sphi 0, %s73
      %s76 = sphi 0, %s75
      %s90 = sphi 0, %s76
      %s94 = sphi 0, %s94
      %s96 = sphi 0, %s94
      %s97 = sphi 0, %s96
      %s111 = sphi 0, %s97
      %s115 = sphi 0, %s115
      %s117 = sphi 0, %s115
      %s118 = sphi 0, %s117
      %s132 = sphi 0, %s118
      %s138 = sphi 0, %s140
      %s141 = sphi 0, %s138
      %s142 = sphi 0, %s141
      %s158 = sphi 0, %s142
    $region4: #{tpu_custom_call.1} parent=1 // loop_header_branch
      %21 = sbr.rel (%p19) target = $region8
    $region5: #{tpu_custom_call.1} parent=1 // loop_body
      %s23 = ssub.s32 %s18, 1
      %s24 = ssub.s32 %s18, 2
      %s25 = sadd.s32 %s18, 1
      %s26 = ssub.s32 %s18, %s25
      %p27 = scmp.eq.s32.totalorder %s26, 0
      %s29 = sadd.s32 %s28, 1
      %s30 = scalar_select %p27, %s28, %s29
      %p33 = pneg %p27
      %p34 = scmp.eq.s32.totalorder %s18, 1
      %p35 = por %p33, %p34
      %p36 = scmp.ne.s32.totalorder %s28, %s31
      %p37 = scmp.eq.s32.totalorder %s18, 0
      %p38 = por %p36, %p37
      %p39 = scmp.ne.s32.totalorder %s28, %s31
      %p40 = scmp.eq.s32.totalorder %s23, 1
      %p41 = por %p39, %p40
      %p42 = scmp.ne.s32.totalorder %s31, %s32
      %p43 = scmp.eq.s32.totalorder %s23, 0
      %p44 = por %p42, %p43
      %p45 = scmp.ne.s32.totalorder %s31, %s32
      %p46 = scmp.eq.s32.totalorder %s24, 1
      %p47 = por %p45, %p46
      %p49 = scmp.ne.s32.totalorder %s32, %s48
      %p50 = scmp.eq.s32.totalorder %s24, 0
      %p51 = por %p49, %p50
      %s53 = sadd.s32 %s52, 1
      %p56 = scmp.eq.s32.totalorder %s18, 1
      %p57 = scmp.ne.s32.totalorder %s52, %s54
      %p58 = scmp.eq.s32.totalorder %s18, 0
      %p59 = por %p57, %p58
      %p60 = scmp.ne.s32.totalorder %s52, %s54
      %p61 = scmp.eq.s32.totalorder %s23, 1
      %p62 = por %p60, %p61
      %p63 = scmp.ne.s32.totalorder %s54, %s55
      %p64 = scmp.eq.s32.totalorder %s23, 0
      %p65 = por %p63, %p64
      %p66 = scmp.ne.s32.totalorder %s54, %s55
      %p67 = scmp.eq.s32.totalorder %s24, 1
      %p68 = por %p66, %p67
      %p70 = scmp.ne.s32.totalorder %s55, %s69
      %p71 = scmp.eq.s32.totalorder %s24, 0
      %p72 = por %p70, %p71
      %s74 = sadd.s32 %s73, 1
      %p77 = scmp.eq.s32.totalorder %s18, 1
      %p78 = scmp.ne.s32.totalorder %s73, %s75
      %p79 = scmp.eq.s32.totalorder %s18, 0
      %p80 = por %p78, %p79
      %p81 = scmp.ne.s32.totalorder %s73, %s75
      %p82 = scmp.eq.s32.totalorder %s23, 1
      %p83 = por %p81, %p82
      %p84 = scmp.ne.s32.totalorder %s75, %s76
      %p85 = scmp.eq.s32.totalorder %s23, 0
      %p86 = por %p84, %p85
      %p87 = scmp.ne.s32.totalorder %s75, %s76
      %p88 = scmp.eq.s32.totalorder %s24, 1
      %p89 = por %p87, %p88
      %p91 = scmp.ne.s32.totalorder %s76, %s90
      %p92 = scmp.eq.s32.totalorder %s24, 0
      %p93 = por %p91, %p92
      %s95 = sadd.s32 %s94, 1
      %p98 = scmp.eq.s32.totalorder %s18, 1
      %p99 = scmp.ne.s32.totalorder %s94, %s96
      %p100 = scmp.eq.s32.totalorder %s18, 0
      %p101 = por %p99, %p100
      %p102 = scmp.ne.s32.totalorder %s94, %s96
      %p103 = scmp.eq.s32.totalorder %s23, 1
      %p104 = por %p102, %p103
      %p105 = scmp.ne.s32.totalorder %s96, %s97
      %p106 = scmp.eq.s32.totalorder %s23, 0
      %p107 = por %p105, %p106
      %p108 = scmp.ne.s32.totalorder %s96, %s97
      %p109 = scmp.eq.s32.totalorder %s24, 1
      %p110 = por %p108, %p109
      %p112 = scmp.ne.s32.totalorder %s97, %s111
      %p113 = scmp.eq.s32.totalorder %s24, 0
      %p114 = por %p112, %p113
      %s116 = sadd.s32 %s115, 1
      %p119 = scmp.eq.s32.totalorder %s18, 1
      %p120 = scmp.ne.s32.totalorder %s115, %s117
      %p121 = scmp.eq.s32.totalorder %s18, 0
      %p122 = por %p120, %p121
      %p123 = scmp.ne.s32.totalorder %s115, %s117
      %p124 = scmp.eq.s32.totalorder %s23, 1
      %p125 = por %p123, %p124
      %p126 = scmp.ne.s32.totalorder %s117, %s118
      %p127 = scmp.eq.s32.totalorder %s23, 0
      %p128 = por %p126, %p127
      %p129 = scmp.ne.s32.totalorder %s117, %s118
      %p130 = scmp.eq.s32.totalorder %s24, 1
      %p131 = por %p129, %p130
      %p133 = scmp.ne.s32.totalorder %s118, %s132
      %p134 = scmp.eq.s32.totalorder %s24, 0
      %p135 = por %p133, %p134
      %s136 = ssub.s32 %s18, %s25
      %p137 = scmp.eq.s32.totalorder %s136, 0
      %s139 = sadd.s32 %s138, 1
      %s140 = scalar_select %p137, %s138, %s139
      %p143 = pneg %p137
      %p144 = scmp.eq.s32.totalorder %s18, 1
      %p145 = por %p143, %p144
      %p146 = scmp.ne.s32.totalorder %s138, %s141
      %p147 = scmp.eq.s32.totalorder %s18, 0
      %p148 = por %p146, %p147
      %p149 = scmp.ne.s32.totalorder %s138, %s141
      %p150 = scmp.eq.s32.totalorder %s23, 1
      %p151 = por %p149, %p150
      %p152 = scmp.ne.s32.totalorder %s141, %s142
      %p153 = scmp.eq.s32.totalorder %s23, 0
      %p154 = por %p152, %p153
      %p155 = scmp.ne.s32.totalorder %s141, %s142
      %p156 = scmp.eq.s32.totalorder %s24, 1
      %p157 = por %p155, %p156
      %p159 = scmp.ne.s32.totalorder %s142, %s158
      %p160 = scmp.eq.s32.totalorder %s24, 0
      %p161 = por %p159, %p160
      %p162 = scmp.le.s32.totalorder 1, %s18
      %p163 = scmp.lt.s32.totalorder %s18, 3
      %p164 = pnand %p162, %p163
      %p165 = pneg %p164
      // Predicated region
      $region9: #{tpu_custom_call.1} parent=5 // pred_check
        _
      $region10: #{tpu_custom_call.1} parent=5 // pred_check_branch
        %167 = sbr.rel (%p164) target = $region12
      $region11: #{tpu_custom_call.1} parent=5 // pred_region
        %s168 = ssub.s32 %s18, 1
        // Predicated region
        $region13: #{tpu_custom_call.1} parent=11 // pred_check
          %p169 = pneg %p65
        $region14: #{tpu_custom_call.1} parent=11 // pred_check_branch
          %171 = sbr.rel (%p169) target = $region16
        $region15: #{tpu_custom_call.1} parent=11 // pred_region
          %s173 = ssub.s32 512, 512
          %174 = vsyncadd [#allocation6], %s173
          %s175 = sshll.u32 [#allocation5], 4
          %s176 = int_to_ptr.vmem [resolvable:$true] %s175
          %181 = dma.hbm_to_vmem [thread:$0]  %s1, 512, %s176, [#allocation6], 128, 128, 8
        $region16: #{tpu_custom_call.1} parent=11 // pred_fallthru
          _
        // Predicated region
        $region17: #{tpu_custom_call.1} parent=11 // pred_check
          %p182 = pneg %p86
        $region18: #{tpu_custom_call.1} parent=11 // pred_check_branch
          %184 = sbr.rel (%p182) target = $region20
        $region19: #{tpu_custom_call.1} parent=11 // pred_region
          _
        $region20: #{tpu_custom_call.1} parent=11 // pred_fallthru
          _
        // Predicated region
        $region21: #{tpu_custom_call.1} parent=11 // pred_check
          %p185 = pneg %p107
        $region22: #{tpu_custom_call.1} parent=11 // pred_check_branch
          %187 = sbr.rel (%p185) target = $region24
        $region23: #{tpu_custom_call.1} parent=11 // pred_region
          _
        $region24: #{tpu_custom_call.1} parent=11 // pred_fallthru
          _
        // Predicated region
        $region25: #{tpu_custom_call.1} parent=11 // pred_check
          %p188 = pneg %p128
        $region26: #{tpu_custom_call.1} parent=11 // pred_check_branch
          %190 = sbr.rel (%p188) target = $region28
        $region27: #{tpu_custom_call.1} parent=11 // pred_region
          _
        $region28: #{tpu_custom_call.1} parent=11 // pred_fallthru
          _
      $region12: #{tpu_custom_call.1} parent=5 // pred_fallthru
        _
      %p191 = scmp.lt.s32.totalorder %s18, 2
      // Predicated region
      $region29: #{tpu_custom_call.1} parent=5 // pred_check
        %p192 = pneg %p191
      $region30: #{tpu_custom_call.1} parent=5 // pred_check_branch
        %194 = sbr.rel (%p192) target = $region32
      $region31: #{tpu_custom_call.1} parent=5 // pred_region
        // Predicated region
        $region33: #{tpu_custom_call.1} parent=31 // pred_check
          %p195 = pneg %p38
        $region34: #{tpu_custom_call.1} parent=31 // pred_check_branch
          %197 = sbr.rel (%p195) target = $region36
        $region35: #{tpu_custom_call.1} parent=31 // pred_region
          %s198 = sand.u32 %s28, 1
          %s199 = scalar_lea.sflag [#allocation3], %s198
          %s200 = sand.u32 %s28, 1
          %s201 = smul.addr %s200, 8
          %s202 = scalar_lea.vmem [#allocation2], %s201
          %s204 = ssub.s32 128, 128
          %205 = vsyncadd %s199, %s204
          %s206 = smul.addr %s18, 128
          %s207 = scalar_lea.hbm %s0, %s206
          %s209 = sshll.u32 %s202, 4
          %s210 = int_to_ptr.vmem [resolvable:$true] %s209
          %212 = dma.hbm_to_vmem [thread:$0]  %s207, 128, %s210, %s199
        $region36: #{tpu_custom_call.1} parent=31 // pred_fallthru
          _
      $region32: #{tpu_custom_call.1} parent=5 // pred_fallthru
        _
      %p213 = scmp.le.s32.totalorder 1, %s18
      %p214 = scmp.lt.s32.totalorder %s18, 3
      %p215 = pnand %p213, %p214
      %p216 = pneg %p215
      // Predicated region
      $region37: #{tpu_custom_call.1} parent=5 // pred_check
        _
      $region38: #{tpu_custom_call.1} parent=5 // pred_check_branch
        %218 = sbr.rel (%p215) target = $region40
      $region39: #{tpu_custom_call.1} parent=5 // pred_region
        %s219 = ssub.s32 %s18, 1
        %s220 = sand.u32 %s31, 1
        %s221 = scalar_lea.sflag [#allocation3], %s220
        %s222 = sand.u32 %s31, 1
        %s223 = smul.addr %s222, 8
        %s224 = scalar_lea.vmem [#allocation2], %s223
        // Predicated region
        $region41: #{tpu_custom_call.1} parent=39 // pred_check
          %p225 = pneg %p44
        $region42: #{tpu_custom_call.1} parent=39 // pred_check_branch
          %227 = sbr.rel (%p225) target = $region44
        $region43: #{tpu_custom_call.1} parent=39 // pred_region
          %228 = dma.done %s221, 128
        $region44: #{tpu_custom_call.1} parent=39 // pred_fallthru
          _
        // Predicated region
        $region45: #{tpu_custom_call.1} parent=39 // pred_check
          %p229 = pneg %p65
        $region46: #{tpu_custom_call.1} parent=39 // pred_check_branch
          %231 = sbr.rel (%p229) target = $region48
        $region47: #{tpu_custom_call.1} parent=39 // pred_region
          %232 = dma.done [#allocation6], 512
        $region48: #{tpu_custom_call.1} parent=39 // pred_fallthru
          _
        %s233 = sand.u32 %s31, 1
        %s234 = scalar_lea.sflag [#allocation3], %s233
        %s235 = sand.u32 %s31, 1
        %s236 = smul.addr %s235, 8
        %s237 = scalar_lea.vmem [#allocation2], %s236
        %p238 = pneg %p44
        %p239 = pneg %p41
        %p240 = pneg %p65
        %p241 = pneg %p62
        %p242 = pneg %p86
        %p243 = pneg %p83
        %p244 = pneg %p107
        %p245 = pneg %p104
        %p246 = pneg %p128
        %p247 = pneg %p125
        %p248 = pneg %p154
        %p249 = pneg %p151
        %s250 = sand.u32 %s141, 1
        %s251 = scalar_lea.sflag [#allocation4], %s250
        %s252 = sand.u32 %s141, 1
        %s253 = smul.addr %s252, 8
        %s254 = scalar_lea.vmem [#allocation7], %s253
        %v255 = vld [vmem:[%s224] sm:$0xff]
        %v256 = vld [vmem:[#allocation5] sm:$0xff]
        %v257 = vld [vmem:[#allocation5 + $0x8] sm:$0xff]
        %v258 = vld [vmem:[#allocation5 + $0x10] sm:$0xff]
        %v259 = vld [vmem:[#allocation5 + $0x18] sm:$0xff]
        %v260 = vld [vmem:[%s2] sm:$0x1]
        %v262 = vlaneseq
        %v263 = vshrl.u32 %v262, 7
        %v264 = vsub.s32 0, %v263
        %v265 = vrot.slane %v260, %v264
        %vm267 = vcmask 261120
        %v269 = vsel %vm267, %v255, 0
        %271 = vmatprep.subr.mxu0 0.0
        %272 = vmatpush1.msra.mxu0 %v256
        %273 = vmatprep.subr.mxu0 0.0
        %274 = vmatpush1.msra.mxu0 %v257
        %275 = vmatprep.subr.mxu0 0.0
        %276 = vmatpush1.msra.mxu0 %v258
        %277 = vmatprep.subr.mxu0 0.0
        %278 = vmatpush1.msra.mxu0 %v259
        %279 = vmatprep.subr.mxu0 0.0
        %280 = vmatpush1.msra.mxu0 0.0
        %281 = vmatprep.subr.mxu0 0.0
        %282 = vmatpush1.msra.mxu0 0.0
        %283 = vmatprep.subr.mxu0 0.0
        %284 = vmatpush1.msra.mxu0 0.0
        %285 = vmatprep.subr.mxu0 0.0
        %286 = vmatpush1.msra.mxu0 0.0
        %287 = vmatprep.subr.mxu0 0.0
        %288 = vmatpush1.msra.mxu0 0.0
        %289 = vmatprep.subr.mxu0 0.0
        %290 = vmatpush1.msra.mxu0 0.0
        %291 = vmatprep.subr.mxu0 0.0
        %292 = vmatpush1.msra.mxu0 0.0
        %293 = vmatprep.subr.mxu0 0.0
        %294 = vmatpush1.msra.mxu0 0.0
        %295 = vmatprep.subr.mxu0 0.0
        %296 = vmatpush1.msra.mxu0 0.0
        %297 = vmatprep.subr.mxu0 0.0
        %298 = vmatpush1.msra.mxu0 0.0
        %299 = vmatprep.subr.mxu0 0.0
        %300 = vmatpush1.msra.mxu0 0.0
        %301 = vmatprep.subr.mxu0 0.0
        %302 = vmatpush1.msra.mxu0 0.0
        %303 = vmatprep.subr.mxu0 0.0
        %304 = vmatpush1.msra.mxu0 0.0
        %305 = vmatprep.subr.mxu0 0.0
        %306 = vmatpush1.msra.mxu0 0.0
        %307 = vmatprep.subr.mxu0 0.0
        %308 = vmatpush1.msra.mxu0 0.0
        %309 = vmatprep.subr.mxu0 0.0
        %310 = vmatpush1.msra.mxu0 0.0
        %311 = vmatprep.subr.mxu0 0.0
        %312 = vmatpush1.msra.mxu0 0.0
        %313 = vmatprep.subr.mxu0 0.0
        %314 = vmatpush1.msra.mxu0 0.0
        %315 = vmatprep.subr.mxu0 0.0
        %316 = vmatpush1.msra.mxu0 0.0
        %317 = vmatprep.subr.mxu0 0.0
        %318 = vmatpush1.msra.mxu0 0.0
        %319 = vmatprep.subr.mxu0 0.0
        %320 = vmatpush1.msra.mxu0 0.0
        %321 = vmatprep.subr.mxu0 0.0
        %322 = vmatpush1.msra.mxu0 0.0
        %323 = vmatprep.subr.mxu0 0.0
        %324 = vmatpush1.msra.mxu0 0.0
        %325 = vmatprep.subr.mxu0 0.0
        %326 = vmatpush1.msra.mxu0 0.0
        %327 = vmatprep.subr.mxu0 0.0
        %328 = vmatpush1.msra.mxu0 0.0
        %329 = vmatprep.subr.mxu0 0.0
        %330 = vmatpush1.msra.mxu0 0.0
        %331 = vmatprep.subr.mxu0 0.0
        %332 = vmatpush1.msra.mxu0 0.0
        %333 = vmatprep.subr.mxu0 0.0
        %334 = vmatpush1.msra.mxu0 0.0
        %335 = vmatprep.mubr.f32.mxu0 0.0
        %336 = vmatmul.mubr.f32.gmra.mrb[0].mxu0 %v269
        %v337 = vpop.f32.mrb[0].mxu0
        %v338 = vadd.f32 %v265, %v337
        %v339 = vpop.f32.mrb[0].mxu0
        %340 = vdwg.mxu0
        %v341 = vsel %vm267, %v338, 0.0
        %342 = vadd.xlane.f32.xlu0 %v341
        %v343 = vpop.xlane.xlu0 %342
        %v344 = vmul.f32 %v338, %v338
        %v345 = vsel %vm267, %v344, 0.0
        %346 = vadd.xlane.f32.xlu0 %v345
        %v347 = vpop.xlane.xlu0 %346
        %v348 = vmul.f32 %v343, 0.03125
        %v349 = vmul.f32 %v347, 0.03125
        %v350 = vmul.f32 %v348, %v348
        %v351 = vsub.f32 %v349, %v350
        %v352 = vmax.f32 %v351, 0.0
        %v353 = vsub.f32 %v338, %v348
        %v354 = vadd.f32 %v352, 1e-05
        %v355 = vrsqrt.pop %v354
        %v356 = vmul.f32 %v353, %v355
        %v357 = vld [vmem:[%s3] sm:$0x1]
        %v359 = vlaneseq
        %v360 = vshrl.u32 %v359, 7
        %v361 = vsub.s32 0, %v360
        %v362 = vrot.slane %v357, %v361
        %v364 = vmul.f32 %v356, %v362
        %v365 = vld [vmem:[%s4] sm:$0x1]
        %v367 = vlaneseq
        %v368 = vshrl.u32 %v367, 7
        %v369 = vsub.s32 0, %v368
        %v370 = vrot.slane %v365, %v369
        %v372 = vadd.f32 %v364, %v370
        %v373 = vmax.f32 %v372, 0.0
        %v374 = vadd.f32 %v255, %v373
        %375 = vst.msk [vmem:[%s254] sm:$0xff] %vm267, %v374
        %s376 = sand.u32 %s141, 1
        %s377 = scalar_lea.sflag [#allocation4], %s376
        %s378 = sand.u32 %s141, 1
        %s379 = smul.addr %s378, 8
        %s380 = scalar_lea.vmem [#allocation7], %s379
        // Predicated region
        $region49: #{tpu_custom_call.1} parent=39 // pred_check
          %p381 = pneg %p151
        $region50: #{tpu_custom_call.1} parent=39 // pred_check_branch
          %383 = sbr.rel (%p381) target = $region52
        $region51: #{tpu_custom_call.1} parent=39 // pred_region
          %s385 = ssub.s32 128, 128
          %386 = vsyncadd %s377, %s385
          %s387 = smul.addr %s23, 128
          %s388 = scalar_lea.hbm %s5, %s387
          %s390 = sshll.u32 %s380, 4
          %s391 = int_to_ptr.vmem [resolvable:$true] %s390
          %393 = dma.vmem_to_hbm [thread:$0]  %s391, 128, %s388, %s377
        $region52: #{tpu_custom_call.1} parent=39 // pred_fallthru
          _
      $region40: #{tpu_custom_call.1} parent=5 // pred_fallthru
        _
      %p394 = scmp.le.s32.totalorder 2, %s18
      // Predicated region
      $region53: #{tpu_custom_call.1} parent=5 // pred_check
        %p395 = pneg %p394
      $region54: #{tpu_custom_call.1} parent=5 // pred_check_branch
        %397 = sbr.rel (%p395) target = $region56
      $region55: #{tpu_custom_call.1} parent=5 // pred_region
        %s398 = ssub.s32 %s18, 2
        // Predicated region
        $region57: #{tpu_custom_call.1} parent=55 // pred_check
          %p399 = pneg %p157
        $region58: #{tpu_custom_call.1} parent=55 // pred_check_branch
          %401 = sbr.rel (%p399) target = $region60
        $region59: #{tpu_custom_call.1} parent=55 // pred_region
          %s402 = sand.u32 %s142, 1
          %s403 = scalar_lea.sflag [#allocation4], %s402
          %s404 = sand.u32 %s142, 1
          %s405 = smul.addr %s404, 8
          %s406 = scalar_lea.vmem [#allocation7], %s405
          %407 = dma.done %s403, 128
        $region60: #{tpu_custom_call.1} parent=55 // pred_fallthru
          _
      $region56: #{tpu_custom_call.1} parent=5 // pred_fallthru
        _
    $region6: #{tpu_custom_call.1} parent=1 // loop_footer
      %s22 = sadd.s32 1, %s18
    $region7: #{tpu_custom_call.1} parent=1 // loop_footer_branch
      %17 = sbr.rel target = $region3
    $region8: #{tpu_custom_call.1} parent=1 // loop_exit
      _
    %408 = vsyncpa [#allocation3], 1
    %s409 = scalar_lea.sflag [#allocation3], 1
    %410 = vsyncpa %s409, 1
    %411 = vsyncpa [#allocation6], 1
    %412 = vsyncpa [#allocation4], 1
    %s413 = scalar_lea.sflag [#allocation4], 1
    %414 = vsyncpa %s413, 1

</llo_original>
